<compile_context>
chip_gen: v7x
topology: tpu7x:2x2x1
jax: 0.10.0
libtpu: 0.0.40
codegen_flags: <defaults>
</compile_context>

<pallas_src>
import functools

import jax
import jax.numpy as jnp
from jax import lax
from jax.experimental import pallas as pl
from jax.experimental.pallas import tpu as pltpu

_INV_SQRT2 = 0.7071067811865476  # 1/sqrt(2)
_MIB = 1024 * 1024
_TILE_BUDGET_BYTES = 32 * _MIB   # double-buffered tile footprint target (fits v7x's 64 MiB VMEM)


def _round_up(x, m):
    return ((x + m - 1) // m) * m


def _intermediate_kernel(x_ref, w_ref, b_ref, o_ref, *, compute_dtype):
    # x_ref: (tm, H)   w_ref: (H, tn)   b_ref: (1, tn)   o_ref: (tm, tn)
    x = x_ref[...].astype(compute_dtype)   # no-op if already compute_dtype
    w = w_ref[...].astype(compute_dtype)
    acc = jnp.dot(x, w, preferred_element_type=jnp.float32)
    acc = acc + b_ref[...].astype(jnp.float32)
    # Exact GELU (erf form) on the f32 accumulator, matching ACT2FN["gelu"].
    # TODO(synk): if the accuracy budget allows, switch to tanh-approx GELU
    # (EUP slot) when the epilogue becomes VALU-bound after the bf16 matmul.
    gelu = 0.5 * acc * (1.0 + lax.erf(acc * _INV_SQRT2))
    o_ref[...] = gelu.astype(o_ref.dtype)


def prepare_dense_params(weight, bias, *, param_dtype=jnp.bfloat16, lane_multiple=128):
    """One-time (model-init) prep: lane-pad the dense params and cast the weight.

    weight: (H, I) -> (H, I_pad) in `param_dtype`; bias: (I,) -> (1, I_pad) f32.
    Doing this once avoids a full weight HBM read+write on every forward call.
    """
    H, I = weight.shape
    I_pad = _round_up(I, lane_multiple)
    if I_pad != I:
        weight = jnp.pad(weight, ((0, 0), (0, I_pad - I)))
        bias = jnp.pad(bias, (0, I_pad - I))
    weight = weight.astype(param_dtype)
    bias2d = bias.reshape(1, I_pad).astype(jnp.float32)  # bias added on the f32 accumulator
    return weight, bias2d


@functools.partial(
    jax.jit, static_argnames=("out_dim", "tm", "tn", "matmul_dtype", "out_dtype"))
def roformer_intermediate(hidden_states, weight_padded, bias_padded, *, out_dim,
                          tm=2048, tn=512, matmul_dtype=jnp.bfloat16, out_dtype=None):
    """hidden_states: (B, S, H); weight_padded: (H, I_pad); bias_padded: (1, I_pad).

    Returns (B, S, out_dim).  `out_dim` is the true intermediate size (I).
    """
    B, S, H = hidden_states.shape
    M = B * S
    I_pad = weight_padded.shape[1]
    if out_dtype is None:
        out_dtype = hidden_states.dtype
    # TODO(synk): pass out_dtype=jnp.bfloat16 when the downstream RoFormerOutput
    # matmul consumes bf16 — halves the M*I writeback.

    x2d = hidden_states.reshape(M, H)  # free view, no copy

    x_item = jnp.dtype(x2d.dtype).itemsize
    w_item = jnp.dtype(weight_padded.dtype).itemsize
    o_item = jnp.dtype(out_dtype).itemsize

    # --- tile selection -------------------------------------------------------
    tm = _round_up(tm, 8)        # sublane-aligned row tile
    tn = _round_up(tn, 128)      # lane-aligned column tile (lane-dense vst)
    tn_eff = min(tn, I_pad)      # I_pad is a multiple of 128, so tn_eff is too

    def footprint(t_m, t_n):
        # double-buffered in/out tiles + the f32 accumulator tile
        return (2 * (t_m * H * x_item + H * t_n * w_item + t_n * 4)
                + 2 * t_m * t_n * o_item + t_m * t_n * 4)

    tm_fit = tm
    while (footprint(min(tm_fit, M), tn_eff) > _TILE_BUDGET_BYTES
           and (tm_fit > 256 or tn_eff > 128)):
        if tm_fit > 256:
            tm_fit //= 2          # stays a multiple of 8
        else:
            tn_eff //= 2          # stays a multiple of 128
    # TODO(synk): for very large H (>= ~8k) add a K grid axis with a VMEM f32
    # accumulator instead of full-K tiles; not needed for RoFormer H (768-1536).

    tm_eff = tm_fit if tm_fit < M else M   # block == full rows is always legal

    grid_m = pl.cdiv(M, tm_eff)
    grid_n = pl.cdiv(I_pad, tn_eff)
    # v7x has 2 TensorCores: keep >= 2 blocks on a parallel axis when possible.
    if grid_m == 1 and grid_n == 1 and M > 8:
        tm_eff = _round_up(pl.cdiv(M, 2), 8)
        grid_m = pl.cdiv(M, tm_eff)

    # --- VMEM limit / cost hint -----------------------------------------------
    vmem_limit = int(min(max(32 * _MIB, footprint(tm_eff, tn_eff) + 16 * _MIB),
                         96 * _MIB))

    cost = pl.CostEstimate(
        flops=int(2 * M * H * I_pad),
        transcendentals=int(M * I_pad),  # one erf per output element
        bytes_accessed=int(M * H * x_item                 # activations, read once
                           + grid_m * H * I_pad * w_item  # weight re-streamed per row-block
                           + grid_m * I_pad * 4           # bias re-read per row-block
                           + M * I_pad * o_item),         # output writeback
    )

    kernel = functools.partial(_intermediate_kernel, compute_dtype=matmul_dtype)

    out = pl.pallas_call(
        kernel,
        out_shape=jax.ShapeDtypeStruct((M, I_pad), out_dtype),
        grid_spec=pltpu.PrefetchScalarGridSpec(
            num_scalar_prefetch=0,
            grid=(grid_m, grid_n),
            in_specs=[
                pl.BlockSpec((tm_eff, H), lambda i, j: (i, 0)),   # activation row tile
                pl.BlockSpec((H, tn_eff), lambda i, j: (0, j)),   # weight column tile
                pl.BlockSpec((1, tn_eff), lambda i, j: (0, j)),   # bias tile
            ],
            out_specs=pl.BlockSpec((tm_eff, tn_eff), lambda i, j: (i, j)),
        ),
        compiler_params=pltpu.CompilerParams(
            dimension_semantics=("parallel", "parallel"),
            vmem_limit_bytes=vmem_limit,
        ),
        cost_estimate=cost,
    )(x2d, weight_padded, bias_padded)

    return out[:, :out_dim].reshape(B, S, out_dim)


def _reference(hidden_states, weight, bias):
    y = jnp.einsum("bsh,hi->bsi", hidden_states, weight) + bias
    return jax.nn.gelu(y, approximate=False)


if __name__ == "__main__":
    # config: hidden_size=32, intermediate_size=64, use_bias=True, hidden_act="gelu"
    B, S, H, I = 2, 8, 32, 64

    key = jax.random.PRNGKey(0)
    k_x, k_w, k_b = jax.random.split(key, 3)

    hidden_states = jax.random.normal(k_x, (B, S, H), dtype=jnp.float32)
    # deterministic "Linear" parameters (synthetic init, no checkpoint load)
    weight = jax.random.normal(k_w, (H, I), dtype=jnp.float32) * (1.0 / jnp.sqrt(H))
    bias = jax.random.normal(k_b, (I,), dtype=jnp.float32) * 0.02

    ref = _reference(hidden_states, weight, bias)

    # Fast deployment path: bf16 operands on the MXU, f32 accumulation.
    w_bf16, b_pad = prepare_dense_params(weight, bias, param_dtype=jnp.bfloat16)
    out = roformer_intermediate(hidden_states, w_bf16, b_pad, out_dim=I)
    out = jax.block_until_ready(out)
    assert out.shape == (B, S, I)
    assert jnp.allclose(out, ref, atol=5e-2, rtol=5e-2), "bf16 path mismatch vs reference"

    # Exact path: f32 operands, matches the PyTorch module's numerics.
    w_f32, b_pad32 = prepare_dense_params(weight, bias, param_dtype=jnp.float32)
    out32 = roformer_intermediate(hidden_states, w_f32, b_pad32, out_dim=I,
                                  matmul_dtype=jnp.float32)
    out32 = jax.block_until_ready(out32)
    assert jnp.allclose(out32, ref, atol=1e-5, rtol=1e-5), "f32 path mismatch vs reference"

    print("KERNEL_OK")
</pallas_src>

<mosaic_0001>
module attributes {stable_mosaic.version = 11 : i64} {
  func.func @_intermediate_kernel(%arg0: i32, %arg1: i32, %arg2: memref<8x32xf32, #tpu.memory_space<vmem>>, %arg3: memref<32x128xbf16, #tpu.memory_space<vmem>>, %arg4: memref<1x128xf32, #tpu.memory_space<vmem>>, %arg5: memref<8x128xf32, #tpu.memory_space<vmem>>) attributes {dimension_semantics = [#tpu.dimension_semantics<parallel>, #tpu.dimension_semantics<parallel>], iteration_bounds = array<i64: 2, 1>, scalar_prefetch = 0 : i64, scratch_operands = 0 : i64, tpu.core_type = #tpu.core_type<tc>, window_params = [{transform_indices = @transform_0, window_bounds = array<i64: 8, 32>}, {transform_indices = @transform_1, window_bounds = array<i64: 32, 128>}, {transform_indices = @transform_2, window_bounds = array<i64: 1, 128>}, {transform_indices = @transform_3, window_bounds = array<i64: 8, 128>}]} {
    %c0 = arith.constant 0 : index
    %c0_0 = arith.constant 0 : index
    %0 = vector.load %arg2[%c0, %c0_0] : memref<8x32xf32, #tpu.memory_space<vmem>>, vector<8x32xf32>
    %1 = arith.truncf %0 : vector<8x32xf32> to vector<8x32xbf16>
    %c0_1 = arith.constant 0 : index
    %c0_2 = arith.constant 0 : index
    %2 = vector.load %arg3[%c0_1, %c0_2] : memref<32x128xbf16, #tpu.memory_space<vmem>>, vector<32x128xbf16>
    %cst = arith.constant dense<0.000000e+00> : vector<8x128xf32>
    %3 = tpu.matmul %1, %2, %cst {dimension_numbers = #tpu.dot_dimension_numbers<[1], [0], [0], [1], [0, 0, 1, 1], [], []>} : vector<8x32xbf16>, vector<32x128xbf16>, vector<8x128xf32> -> vector<8x128xf32>
    %c0_3 = arith.constant 0 : index
    %c0_4 = arith.constant 0 : index
    %4 = vector.load %arg4[%c0_3, %c0_4] : memref<1x128xf32, #tpu.memory_space<vmem>>, vector<1x128xf32>
    %5 = vector.broadcast %4 : vector<1x128xf32> to vector<8x128xf32>
    %6 = arith.addf %3, %5 : vector<8x128xf32>
    %cst_5 = arith.constant 5.000000e-01 : f32
    %7 = vector.broadcast %cst_5 : f32 to vector<8x128xf32>
    %8 = arith.mulf %7, %6 : vector<8x128xf32>
    %cst_6 = arith.constant 0.707106769 : f32
    %9 = vector.broadcast %cst_6 : f32 to vector<8x128xf32>
    %10 = arith.mulf %6, %9 : vector<8x128xf32>
    %11 = math.erf %10 : vector<8x128xf32>
    %cst_7 = arith.constant 1.000000e+00 : f32
    %12 = vector.broadcast %cst_7 : f32 to vector<8x128xf32>
    %13 = arith.addf %12, %11 : vector<8x128xf32>
    %14 = arith.mulf %8, %13 : vector<8x128xf32>
    %c0_8 = arith.constant 0 : index
    %c0_9 = arith.constant 0 : index
    %15 = vector.load %arg5[%c0_8, %c0_9] : memref<8x128xf32, #tpu.memory_space<vmem>>, vector<8x128xf32>
    tpu.vector_store %arg5[%c0_8, %c0_9], %14 {strides = array<i32>} : memref<8x128xf32, #tpu.memory_space<vmem>>, vector<8x128xf32>,
    return
  }
  func.func @transform_0(%arg0: i32, %arg1: i32) -> (i32, i32) {
    %c0_i32 = arith.constant 0 : i32
    %c0_i32_0 = arith.constant 0 : i32
    return %arg0, %c0_i32 : i32, i32
  }
  func.func @transform_1(%arg0: i32, %arg1: i32) -> (i32, i32) {
    %c0_i32 = arith.constant 0 : i32
    %c0_i32_0 = arith.constant 0 : i32
    return %c0_i32, %arg1 : i32, i32
  }
  func.func @transform_2(%arg0: i32, %arg1: i32) -> (i32, i32) {
    %c0_i32 = arith.constant 0 : i32
    %c0_i32_0 = arith.constant 0 : i32
    return %c0_i32, %arg1 : i32, i32
  }
  func.func @transform_3(%arg0: i32, %arg1: i32) -> (i32, i32) {
    %c0_i32 = arith.constant 0 : i32
    return %arg0, %arg1 : i32, i32
  }
}

</mosaic_0001>

<llo_original>
// kernel: roformer_intermediate.1
$region0: #{roformer_intermediate.1}
  #allocation0 [shape = 'u32[]', space=smem, size = 0x4, offset = 0x4, fixed_abs, tag = 'smem constant byte address 0x4 - core index']
  #allocation1 [shape = 'u32[144,128]{1,0:T(1,128)}', space=vmem, size = 0x12000, scoped, tag = 'internal scratch']
  %s0 = inlined_call_operand.hbm [shape: f32[16,32], index: 0, kind: input, shape index: {}]
  %s1 = inlined_call_operand.hbm [shape: bf16[32,128], index: 1, kind: input, shape index: {}]
  %s2 = inlined_call_operand.vmem [shape: f32[1,128], index: 2, kind: input, shape index: {}]
  %s3 = inlined_call_operand.vmem [shape: f32[16,128], index: 3, kind: output, shape index: {}]
  %s4 = sld [smem:[#allocation0]]
  $region53: #{roformer_intermediate.1} parent=0
    _
  %s6 = ssub.s32 1, %s4
  %s7 = scalar_select 0, %s6, %s4
  $region1: #{roformer_intermediate.1} parent=0
    #allocation2 [shape = 'u8[8192]{0}', space=vmem, size = 0x2000, scoped, tag = 'input window, operand 0']
    #allocation3 [shape = 's32[2]{0}', space=sflag, size = 0x8, scoped, tag = 'scoped memory for roformer_intermediate.1']
    #allocation4 [shape = 'u8[8192]{0}', space=vmem, size = 0x2000, scoped, tag = 'input window, operand 1, single buffered']
    #allocation5 [shape = 's32[1]{0}', space=sflag, size = 0x4, scoped, tag = 'scoped memory for roformer_intermediate.1']
    %8 = vsyncpa [#allocation3], 0
    %s9 = scalar_lea.sflag [#allocation3], 1
    %10 = vsyncpa %s9, 0
    %11 = vsyncpa [#allocation5], 0
    loop: start=0, step=1, limit=4
    $region2: #{roformer_intermediate.1} parent=1 // loop_pre_header
      _
    $region3: #{roformer_intermediate.1} parent=1 // loop_header
      %s13 = sphi 0, %s17
      %p14 = scmp.ge.s32.totalorder %s13, 4
      %s20 = sphi 0, %s32
      %s21 = sphi 0, %s28
      %s22 = sphi 0, %s20
      %s23 = sphi 0, %s21
      %s24 = sphi 0, %s22
      %s25 = sphi 0, %s23
      %s35 = sphi 0, %s37
      %s38 = sphi 0, %s35
      %s39 = sphi 0, %s38
      %s55 = sphi 0, %s39
      %s61 = sphi 0, %s63
      %s64 = sphi 0, %s61
      %s65 = sphi 0, %s64
      %s81 = sphi 0, %s65
      %s87 = sphi 0, %s89
      %s90 = sphi 0, %s87
      %s91 = sphi 0, %s90
      %s107 = sphi 0, %s91
      %s115 = sphi 0, %s117
      %s118 = sphi 0, %s115
      %s119 = sphi 0, %s118
      %s135 = sphi 0, %s119
    $region4: #{roformer_intermediate.1} parent=1 // loop_header_branch
      %16 = sbr.rel (%p14) target = $region8
    $region5: #{roformer_intermediate.1} parent=1 // loop_body
      %s18 = ssub.s32 %s13, 1
      %s19 = ssub.s32 %s13, 2
      %s26 = sadd.s32 1, %s21
      %p27 = scmp.ge.s32.totalorder %s26, 1
      %s28 = scalar_select %p27, 0, %s26
      %s29 = sadd.s32 1, %s20
      %s30 = scalar_select %p27, %s29, %s20
      %p31 = scmp.ge.s32.totalorder %s30, 2
      %s32 = scalar_select %p31, 0, %s30
      %s33 = ssub.s32 %s20, %s32
      %p34 = scmp.eq.s32.totalorder %s33, 0
      %s36 = sadd.s32 %s35, 1
      %s37 = scalar_select %p34, %s35, %s36
      %p40 = pneg %p34
      %p41 = scmp.eq.s32.totalorder %s13, 1
      %p42 = por %p40, %p41
      %p43 = scmp.ne.s32.totalorder %s35, %s38
      %p44 = scmp.eq.s32.totalorder %s13, 0
      %p45 = por %p43, %p44
      %p46 = scmp.ne.s32.totalorder %s35, %s38
      %p47 = scmp.eq.s32.totalorder %s18, 1
      %p48 = por %p46, %p47
      %p49 = scmp.ne.s32.totalorder %s38, %s39
      %p50 = scmp.eq.s32.totalorder %s18, 0
      %p51 = por %p49, %p50
      %p52 = scmp.ne.s32.totalorder %s38, %s39
      %p53 = scmp.eq.s32.totalorder %s19, 1
      %p54 = por %p52, %p53
      %p56 = scmp.ne.s32.totalorder %s39, %s55
      %p57 = scmp.eq.s32.totalorder %s19, 0
      %p58 = por %p56, %p57
      %s59 = ssub.s32 %s21, %s28
      %p60 = scmp.eq.s32.totalorder %s59, 0
      %s62 = sadd.s32 %s61, 1
      %s63 = scalar_select %p60, %s61, %s62
      %p66 = pneg %p60
      %p67 = scmp.eq.s32.totalorder %s13, 1
      %p68 = por %p66, %p67
      %p69 = scmp.ne.s32.totalorder %s61, %s64
      %p70 = scmp.eq.s32.totalorder %s13, 0
      %p71 = por %p69, %p70
      %p72 = scmp.ne.s32.totalorder %s61, %s64
      %p73 = scmp.eq.s32.totalorder %s18, 1
      %p74 = por %p72, %p73
      %p75 = scmp.ne.s32.totalorder %s64, %s65
      %p76 = scmp.eq.s32.totalorder %s18, 0
      %p77 = por %p75, %p76
      %p78 = scmp.ne.s32.totalorder %s64, %s65
      %p79 = scmp.eq.s32.totalorder %s19, 1
      %p80 = por %p78, %p79
      %p82 = scmp.ne.s32.totalorder %s65, %s81
      %p83 = scmp.eq.s32.totalorder %s19, 0
      %p84 = por %p82, %p83
      %s85 = ssub.s32 %s21, %s28
      %p86 = scmp.eq.s32.totalorder %s85, 0
      %s88 = sadd.s32 %s87, 1
      %s89 = scalar_select %p86, %s87, %s88
      %p92 = pneg %p86
      %p93 = scmp.eq.s32.totalorder %s13, 1
      %p94 = por %p92, %p93
      %p95 = scmp.ne.s32.totalorder %s87, %s90
      %p96 = scmp.eq.s32.totalorder %s13, 0
      %p97 = por %p95, %p96
      %p98 = scmp.ne.s32.totalorder %s87, %s90
      %p99 = scmp.eq.s32.totalorder %s18, 1
      %p100 = por %p98, %p99
      %p101 = scmp.ne.s32.totalorder %s90, %s91
      %p102 = scmp.eq.s32.totalorder %s18, 0
      %p103 = por %p101, %p102
      %p104 = scmp.ne.s32.totalorder %s90, %s91
      %p105 = scmp.eq.s32.totalorder %s19, 1
      %p106 = por %p104, %p105
      %p108 = scmp.ne.s32.totalorder %s91, %s107
      %p109 = scmp.eq.s32.totalorder %s19, 0
      %p110 = por %p108, %p109
      %s111 = ssub.s32 %s20, %s32
      %s112 = ssub.s32 %s21, %s28
      %s113 = sor.u32 %s111, %s112
      %p114 = scmp.eq.s32.totalorder %s113, 0
      %s116 = sadd.s32 %s115, 1
      %s117 = scalar_select %p114, %s115, %s116
      %p120 = pneg %p114
      %p121 = scmp.eq.s32.totalorder %s13, 1
      %p122 = por %p120, %p121
      %p123 = scmp.ne.s32.totalorder %s115, %s118
      %p124 = scmp.eq.s32.totalorder %s13, 0
      %p125 = por %p123, %p124
      %p126 = scmp.ne.s32.totalorder %s115, %s118
      %p127 = scmp.eq.s32.totalorder %s18, 1
      %p128 = por %p126, %p127
      %p129 = scmp.ne.s32.totalorder %s118, %s119
      %p130 = scmp.eq.s32.totalorder %s18, 0
      %p131 = por %p129, %p130
      %p132 = scmp.ne.s32.totalorder %s118, %s119
      %p133 = scmp.eq.s32.totalorder %s19, 1
      %p134 = por %p132, %p133
      %p136 = scmp.ne.s32.totalorder %s119, %s135
      %p137 = scmp.eq.s32.totalorder %s19, 0
      %p138 = por %p136, %p137
      %p139 = scmp.le.s32.totalorder 1, %s13
      %p140 = scmp.lt.s32.totalorder %s13, 3
      %p141 = pnand %p139, %p140
      %p142 = pneg %p141
      // Predicated region
      $region9: #{roformer_intermediate.1} parent=5 // pred_check
        _
      $region10: #{roformer_intermediate.1} parent=5 // pred_check_branch
        %144 = sbr.rel (%p141) target = $region12
      $region11: #{roformer_intermediate.1} parent=5 // pred_region
        %s145 = ssub.s32 %s13, 1
        // Predicated region
        $region13: #{roformer_intermediate.1} parent=11 // pred_check
          %p146 = pneg %p77
        $region14: #{roformer_intermediate.1} parent=11 // pred_check_branch
          %148 = sbr.rel (%p146) target = $region16
        $region15: #{roformer_intermediate.1} parent=11 // pred_region
          %s150 = ssub.s32 256, 256
          %151 = vsyncadd [#allocation5], %s150
          %s152 = smul.addr %s23, 64
          %s153 = scalar_lea.hbm %s1, %s152
          %s154 = sshll.u32 [#allocation4], 4
          %s155 = int_to_ptr.vmem [resolvable:$true] %s154
          %160 = dma.hbm_to_vmem [thread:$0]  %s153, 256, %s155, [#allocation5], 64, 64, 4
        $region16: #{roformer_intermediate.1} parent=11 // pred_fallthru
          _
        // Predicated region
        $region17: #{roformer_intermediate.1} parent=11 // pred_check
          %p161 = pneg %p103
        $region18: #{roformer_intermediate.1} parent=11 // pred_check_branch
          %163 = sbr.rel (%p161) target = $region20
        $region19: #{roformer_intermediate.1} parent=11 // pred_region
          %p164 = scmp.lt.s32.totalorder %s23, 0
          %s165 = scalar_select %p164, %s23, 0
          %s166 = scalar_lea.vmem %s2, %s165
        $region20: #{roformer_intermediate.1} parent=11 // pred_fallthru
          _
      $region12: #{roformer_intermediate.1} parent=5 // pred_fallthru
        _
      %p167 = scmp.lt.s32.totalorder %s13, 2
      // Predicated region
      $region21: #{roformer_intermediate.1} parent=5 // pred_check
        %p168 = pneg %p167
      $region22: #{roformer_intermediate.1} parent=5 // pred_check_branch
        %170 = sbr.rel (%p168) target = $region24
      $region23: #{roformer_intermediate.1} parent=5 // pred_region
        // Predicated region
        $region25: #{roformer_intermediate.1} parent=23 // pred_check
          %p171 = pneg %p45
        $region26: #{roformer_intermediate.1} parent=23 // pred_check_branch
          %173 = sbr.rel (%p171) target = $region28
        $region27: #{roformer_intermediate.1} parent=23 // pred_region
          %s174 = sand.u32 %s35, 1
          %s175 = scalar_lea.sflag [#allocation3], %s174
          %s176 = sand.u32 %s35, 1
          %s177 = smul.addr %s176, 8
          %s178 = scalar_lea.vmem [#allocation2], %s177
          %s180 = ssub.s32 128, 128
          %181 = vsyncadd %s175, %s180
          %s182 = smul.addr %s20, 128
          %s183 = scalar_lea.hbm %s0, %s182
          %s185 = sshll.u32 %s178, 4
          %s186 = int_to_ptr.vmem [resolvable:$true] %s185
          %188 = dma.hbm_to_vmem [thread:$0]  %s183, 128, %s186, %s175
        $region28: #{roformer_intermediate.1} parent=23 // pred_fallthru
          _
      $region24: #{roformer_intermediate.1} parent=5 // pred_fallthru
        _
      %p189 = scmp.le.s32.totalorder 1, %s13
      %p190 = scmp.lt.s32.totalorder %s13, 3
      %p191 = pnand %p189, %p190
      %p192 = pneg %p191
      // Predicated region
      $region29: #{roformer_intermediate.1} parent=5 // pred_check
        _
      $region30: #{roformer_intermediate.1} parent=5 // pred_check_branch
        %194 = sbr.rel (%p191) target = $region32
      $region31: #{roformer_intermediate.1} parent=5 // pred_region
        %s195 = ssub.s32 %s13, 1
        %s196 = sand.u32 %s38, 1
        %s197 = scalar_lea.sflag [#allocation3], %s196
        %s198 = sand.u32 %s38, 1
        %s199 = smul.addr %s198, 8
        %s200 = scalar_lea.vmem [#allocation2], %s199
        // Predicated region
        $region33: #{roformer_intermediate.1} parent=31 // pred_check
          %p201 = pneg %p51
        $region34: #{roformer_intermediate.1} parent=31 // pred_check_branch
          %203 = sbr.rel (%p201) target = $region36
        $region35: #{roformer_intermediate.1} parent=31 // pred_region
          %204 = dma.done %s197, 128
        $region36: #{roformer_intermediate.1} parent=31 // pred_fallthru
          _
        // Predicated region
        $region37: #{roformer_intermediate.1} parent=31 // pred_check
          %p205 = pneg %p77
        $region38: #{roformer_intermediate.1} parent=31 // pred_check_branch
          %207 = sbr.rel (%p205) target = $region40
        $region39: #{roformer_intermediate.1} parent=31 // pred_region
          %208 = dma.done [#allocation5], 256
        $region40: #{roformer_intermediate.1} parent=31 // pred_fallthru
          _
        %s209 = sand.u32 %s38, 1
        %s210 = scalar_lea.sflag [#allocation3], %s209
        %s211 = sand.u32 %s38, 1
        %s212 = smul.addr %s211, 8
        %s213 = scalar_lea.vmem [#allocation2], %s212
        %p214 = pneg %p51
        %p215 = pneg %p48
        %p216 = pneg %p77
        %p217 = pneg %p74
        %p218 = scmp.lt.s32.totalorder %s23, 0
        %s219 = scalar_select %p218, %s23, 0
        %s220 = scalar_lea.vmem %s2, %s219
        %p221 = pneg %p103
        %p222 = pneg %p100
        %p223 = pneg %p131
        %p224 = pneg %p128
        %p225 = scmp.lt.s32.totalorder %s22, 1
        %s226 = scalar_select %p225, %s22, 1
        %p227 = scmp.lt.s32.totalorder %s23, 0
        %s228 = scalar_select %p227, %s23, 0
        %s229 = sadd.s32 %s228, %s226
        %s230 = smul.addr %s229, 8
        %s231 = scalar_lea.vmem %s3, %s230
        %p232 = scmp.lt.s32.totalorder %s23, 0
        %s233 = scalar_select %p232, %s23, 0
        %s234 = scalar_lea.vmem %s2, %s233
        %p235 = scmp.lt.s32.totalorder %s22, 1
        %s236 = scalar_select %p235, %s22, 1
        %p237 = scmp.lt.s32.totalorder %s23, 0
        %s238 = scalar_select %p237, %s23, 0
        %s239 = sadd.s32 %s238, %s236
        %s240 = smul.addr %s239, 8
        %s241 = scalar_lea.vmem %s3, %s240
        %v243 = vld [vmem:[%s200] sm:$0xff]
        %v244 = vpack.c.bf16 %v243, %v243
        %v245 = vld [vmem:[#allocation4] sm:$0xf]
        %v246 = vld [vmem:[#allocation4 + $0x4] sm:$0xf]
        %v247 = vld [vmem:[#allocation4 + $0x8] sm:$0xf]
        %v248 = vld [vmem:[#allocation4 + $0xc] sm:$0xf]
        %v249 = vld [vmem:[%s234] sm:$0x1]
        %v251 = vlaneseq
        %v252 = vshrl.u32 %v251, 7
        %v253 = vsub.s32 0, %v252
        %v254 = vrot.slane %v249, %v253
        %v260 = vunpack.c.l.b16 %v245
        %v261 = vunpack.c.l.b16 %v246
        %v262 = vunpack.c.l.b16 %v247
        %v263 = vunpack.c.l.b16 %v248
        %v264 = vpack.c.b16 %v261, %v260
        %v265 = vpack.c.b16 %v263, %v262
        %vm268 = vcmask 261120
        %v270 = vsel %vm268, %v244, 0
        %272 = vmatprep.subr.bf16.mxu0 0
        %273 = vmatpush1.bf16.msra.mxu0 %v264
        %274 = vmatprep.subr.bf16.mxu0 0
        %275 = vmatpush1.bf16.msra.mxu0 %v265
        %276 = vmatprep.subr.bf16.mxu0 0
        %277 = vmatpush1.bf16.msra.mxu0 0
        %278 = vmatprep.subr.bf16.mxu0 0
        %279 = vmatpush1.bf16.msra.mxu0 0
        %280 = vmatprep.subr.bf16.mxu0 0
        %281 = vmatpush1.bf16.msra.mxu0 0
        %282 = vmatprep.subr.bf16.mxu0 0
        %283 = vmatpush1.bf16.msra.mxu0 0
        %284 = vmatprep.subr.bf16.mxu0 0
        %285 = vmatpush1.bf16.msra.mxu0 0
        %286 = vmatprep.subr.bf16.mxu0 0
        %287 = vmatpush1.bf16.msra.mxu0 0
        %288 = vmatprep.subr.bf16.mxu0 0
        %289 = vmatpush1.bf16.msra.mxu0 0
        %290 = vmatprep.subr.bf16.mxu0 0
        %291 = vmatpush1.bf16.msra.mxu0 0
        %292 = vmatprep.subr.bf16.mxu0 0
        %293 = vmatpush1.bf16.msra.mxu0 0
        %294 = vmatprep.subr.bf16.mxu0 0
        %295 = vmatpush1.bf16.msra.mxu0 0
        %296 = vmatprep.subr.bf16.mxu0 0
        %297 = vmatpush1.bf16.msra.mxu0 0
        %298 = vmatprep.subr.bf16.mxu0 0
        %299 = vmatpush1.bf16.msra.mxu0 0
        %300 = vmatprep.subr.bf16.mxu0 0
        %301 = vmatpush1.bf16.msra.mxu0 0
        %302 = vmatprep.subr.bf16.mxu0 0
        %303 = vmatpush1.bf16.msra.mxu0 0
        %304 = vmatprep.mubr.bf16.mxu0 0
        %305 = vmatmul.mubr.bf16.gmra.mrb[0].mxu0 %v270
        %v306 = vpop.f32.mrb[0].mxu0
        %v307 = vadd.f32 %v254, %v306
        %v308 = vpop.f32.mrb[0].mxu0
        %v309 = vpop.f32.mrb[0].mxu0
        %v310 = vpop.f32.mrb[0].mxu0
        %311 = vdwg.mxu0
        %v312 = vmul.f32 %v307, 0.5
        %v313 = vmul.f32 %v307, 0.70710677
        %v314 = verf.f32.pop %v313
        %v315 = vadd.f32 %v314, 1.0
        %v316 = vmul.f32 %v312, %v315
        %317 = vst [vmem:[%s241] sm:$0xff] %v316
        %p318 = scmp.lt.s32.totalorder %s22, 1
        %s319 = scalar_select %p318, %s22, 1
        %p320 = scmp.lt.s32.totalorder %s23, 0
        %s321 = scalar_select %p320, %s23, 0
        %s322 = sadd.s32 %s321, %s319
        %s323 = smul.addr %s322, 8
        %s324 = scalar_lea.vmem %s3, %s323
        // Predicated region
        $region41: #{roformer_intermediate.1} parent=31 // pred_check
          %p325 = pneg %p128
        $region42: #{roformer_intermediate.1} parent=31 // pred_check_branch
          %327 = sbr.rel (%p325) target = $region44
        $region43: #{roformer_intermediate.1} parent=31 // pred_region
          _
        $region44: #{roformer_intermediate.1} parent=31 // pred_fallthru
          _
      $region32: #{roformer_intermediate.1} parent=5 // pred_fallthru
        _
      %p328 = scmp.le.s32.totalorder 2, %s13
      // Predicated region
      $region45: #{roformer_intermediate.1} parent=5 // pred_check
        %p329 = pneg %p328
      $region46: #{roformer_intermediate.1} parent=5 // pred_check_branch
        %331 = sbr.rel (%p329) target = $region48
      $region47: #{roformer_intermediate.1} parent=5 // pred_region
        %s332 = ssub.s32 %s13, 2
        // Predicated region
        $region49: #{roformer_intermediate.1} parent=47 // pred_check
          %p333 = pneg %p134
        $region50: #{roformer_intermediate.1} parent=47 // pred_check_branch
          %335 = sbr.rel (%p333) target = $region52
        $region51: #{roformer_intermediate.1} parent=47 // pred_region
          %p336 = scmp.lt.s32.totalorder %s24, 1
          %s337 = scalar_select %p336, %s24, 1
          %p338 = scmp.lt.s32.totalorder %s25, 0
          %s339 = scalar_select %p338, %s25, 0
          %s340 = sadd.s32 %s339, %s337
          %s341 = smul.addr %s340, 8
          %s342 = scalar_lea.vmem %s3, %s341
        $region52: #{roformer_intermediate.1} parent=47 // pred_fallthru
          _
      $region48: #{roformer_intermediate.1} parent=5 // pred_fallthru
        _
    $region6: #{roformer_intermediate.1} parent=1 // loop_footer
      %s17 = sadd.s32 1, %s13
    $region7: #{roformer_intermediate.1} parent=1 // loop_footer_branch
      %12 = sbr.rel target = $region3
    $region8: #{roformer_intermediate.1} parent=1 // loop_exit
      _
    %343 = vsyncpa [#allocation3], 1
    %s344 = scalar_lea.sflag [#allocation3], 1
    %345 = vsyncpa %s344, 1
    %346 = vsyncpa [#allocation5], 1

</llo_original>
